<compile_context>
chip_gen: v6e
topology: v6e:2x2x1
jax: 0.10.0
libtpu: 0.0.40
codegen_flags: <defaults>
</compile_context>

<pallas_src>
import functools

import jax
import jax.numpy as jnp
from jax import lax
from jax.experimental import pallas as pl
from jax.experimental.pallas import tpu as pltpu

_LANES = 128
_TARGET_BLOCK_BYTES = 1 << 20   # ~1 MiB per input block
_NUM_CORE_SPLITS = 2            # leading "parallel" axis; shards across TCs on v7x


# ---------------------------------------------------------------------------
# Elementwise BCE math
# ---------------------------------------------------------------------------

def _bce_term(x, target_one: bool, with_logits: bool):
    """Per-element BCE term in f32 (matches PyTorch reduction='none')."""
    if with_logits:
        # BCEWithLogitsLoss (stable): max(x,0) - x*y + log1p(exp(-|x|))
        base = jnp.maximum(x, 0.0) + jnp.log1p(jnp.exp(-jnp.abs(x)))
        return (base - x) if target_one else base
    # BCELoss with log() clamped at -100 (PyTorch behavior).
    if target_one:
        return -jnp.maximum(jnp.log(x), -100.0)
    return -jnp.maximum(jnp.log(1.0 - x), -100.0)


def _pad_value(target_one: bool, with_logits: bool) -> float:
    """Padding value whose BCE term is exactly zero."""
    if with_logits:
        return 1e4 if target_one else -1e4
    return 1.0 if target_one else 0.0


# ---------------------------------------------------------------------------
# Layout / host-side prep
# ---------------------------------------------------------------------------

def _layout(n: int, dtype):
    """Tiling for a lane-dense (rows, 128) slab of n elements of `dtype`.

    Returns (blk_rows, slab_rows, n_blocks, num_splits, blocks_per_core).
    """
    itemsize = jnp.dtype(dtype).itemsize
    sublane = max(8, 32 // itemsize)                  # 8 f32 / 16 bf16 / 32 int8
    total_rows = -(-n // _LANES)                      # ceil(n / 128)
    max_blk = _TARGET_BLOCK_BYTES // (_LANES * itemsize)  # 2048 f32 / 4096 bf16

    if total_rows >= max_blk:
        blk_rows = max_blk                            # multiple of 32 -> any packing
        slab_rows = total_rows                        # no row padding; mask edges
    else:
        blk_rows = -(-total_rows // sublane) * sublane
        slab_rows = blk_rows                          # tiny pad -> one full block

    n_blocks = -(-slab_rows // blk_rows)
    num_splits = min(_NUM_CORE_SPLITS, n_blocks)
    blocks_per_core = -(-n_blocks // num_splits)
    return blk_rows, slab_rows, n_blocks, num_splits, blocks_per_core


def _prep(x, pad_value: float, slab_rows: int):
    """Flatten and view as (slab_rows, 128); zero-copy when already aligned."""
    flat = x.reshape(-1)
    padded_n = slab_rows * _LANES
    if padded_n > flat.size:
        # Only reached when x.size is not a multiple of 128 (or the input is
        # smaller than one block).  Pad with a BCE-neutral value.
        # TODO(synk): this jnp.pad copies the array; a manual-DMA tail handler
        # could avoid it, but the lane-aligned common case is zero-copy.
        flat = jnp.pad(flat, (0, padded_n - flat.size), constant_values=pad_value)
    return flat.reshape(slab_rows, _LANES)


def _compiler_params():
    return pltpu.CompilerParams(dimension_semantics=("parallel", "arbitrary"),
                                vmem_limit_bytes=32 * 1024 * 1024)


def _reduce_to_vreg(term):
    """(blk_rows, 128) -> (8, 128) partial sum with pure vreg adds (no XLU)."""
    return term.reshape(-1, 8, _LANES).sum(axis=0)


def _row_mask(shape, valid_rows, blk_rows, blocks_per_core):
    """Mask rows of the current block that lie beyond the valid slab."""
    gblk = pl.program_id(0) * blocks_per_core + pl.program_id(1)
    rows_left = valid_rows - gblk * blk_rows
    rid = lax.broadcasted_iota(jnp.int32, shape, 0)
    return rid < rows_left


# ---------------------------------------------------------------------------
# Kernels
# ---------------------------------------------------------------------------

def _bce_single_kernel(x_ref, out_ref, *, target_one: bool, with_logits: bool,
                       blk_rows: int, blocks_per_core: int, valid_rows: int,
                       mask_needed: bool):
    i = pl.program_id(1)

    @pl.when(i == 0)
    def _():
        out_ref[...] = jnp.zeros_like(out_ref)

    term = _bce_term(x_ref[...].astype(jnp.float32), target_one, with_logits)
    if mask_needed:
        valid = _row_mask(term.shape, valid_rows, blk_rows, blocks_per_core)
        term = jnp.where(valid, term, 0.0)
    out_ref[...] += _reduce_to_vreg(term)


def _bce_fused_kernel(r_ref, f_ref, out_r_ref, out_f_ref, *, with_logits: bool,
                      blk_rows: int, blocks_per_core: int, valid_rows: int,
                      mask_needed: bool):
    i = pl.program_id(1)

    @pl.when(i == 0)
    def _():
        out_r_ref[...] = jnp.zeros_like(out_r_ref)
        out_f_ref[...] = jnp.zeros_like(out_f_ref)

    term_r = _bce_term(r_ref[...].astype(jnp.float32), True, with_logits)
    term_f = _bce_term(f_ref[...].astype(jnp.float32), False, with_logits)
    if mask_needed:
        valid = _row_mask(term_r.shape, valid_rows, blk_rows, blocks_per_core)
        term_r = jnp.where(valid, term_r, 0.0)
        term_f = jnp.where(valid, term_f, 0.0)
    out_r_ref[...] += _reduce_to_vreg(term_r)
    out_f_ref[...] += _reduce_to_vreg(term_f)


# ---------------------------------------------------------------------------
# Wrappers
# ---------------------------------------------------------------------------

def _bce_mean(x, *, target_one: bool, with_logits: bool):
    n = x.size
    blk_rows, slab_rows, n_blocks, num_splits, bpc = _layout(n, x.dtype)
    x2d = _prep(x, _pad_value(target_one, with_logits), slab_rows)
    mask_needed = num_splits * bpc * blk_rows > slab_rows
    last_blk = n_blocks - 1

    def in_map(c, i):
        return (jnp.minimum(c * bpc + i, last_blk), 0)

    kern = functools.partial(
        _bce_single_kernel, target_one=target_one, with_logits=with_logits,
        blk_rows=blk_rows, blocks_per_core=bpc, valid_rows=slab_rows,
        mask_needed=mask_needed)

    partials = pl.pallas_call(
        kern,
        out_shape=jax.ShapeDtypeStruct((num_splits * 8, _LANES), jnp.float32),
        grid_spec=pltpu.PrefetchScalarGridSpec(
            num_scalar_prefetch=0,
            grid=(num_splits, bpc),
            in_specs=[pl.BlockSpec((blk_rows, _LANES), in_map)],
            out_specs=pl.BlockSpec((8, _LANES), lambda c, i: (c, 0))),
        compiler_params=_compiler_params(),
    )(x2d)
    return jnp.sum(partials) * (1.0 / float(n))


def _bce_mean_pair(d_real, d_fake, *, with_logits: bool):
    """Fused mean BCE(d_real, ones) and BCE(d_fake, zeros) in one launch."""
    n = d_real.size
    blk_rows, slab_rows, n_blocks, num_splits, bpc = _layout(n, d_real.dtype)
    xr = _prep(d_real, _pad_value(True, with_logits), slab_rows)
    xf = _prep(d_fake, _pad_value(False, with_logits), slab_rows)
    mask_needed = num_splits * bpc * blk_rows > slab_rows
    last_blk = n_blocks - 1

    def in_map(c, i):
        return (jnp.minimum(c * bpc + i, last_blk), 0)

    kern = functools.partial(
        _bce_fused_kernel, with_logits=with_logits, blk_rows=blk_rows,
        blocks_per_core=bpc, valid_rows=slab_rows, mask_needed=mask_needed)

    out_r, out_f = pl.pallas_call(
        kern,
        out_shape=(jax.ShapeDtypeStruct((num_splits * 8, _LANES), jnp.float32),
                   jax.ShapeDtypeStruct((num_splits * 8, _LANES), jnp.float32)),
        grid_spec=pltpu.PrefetchScalarGridSpec(
            num_scalar_prefetch=0,
            grid=(num_splits, bpc),
            in_specs=[pl.BlockSpec((blk_rows, _LANES), in_map),
                      pl.BlockSpec((blk_rows, _LANES), in_map)],
            out_specs=(pl.BlockSpec((8, _LANES), lambda c, i: (c, 0)),
                       pl.BlockSpec((8, _LANES), lambda c, i: (c, 0)))),
        compiler_params=_compiler_params(),
    )(xr, xf)
    inv_n = 1.0 / float(n)
    return jnp.sum(out_r) * inv_n, jnp.sum(out_f) * inv_n


@functools.partial(jax.jit, static_argnames=("with_logits",))
def _forward_d_impl(d_real, d_fake, with_logits):
    if d_real.shape == d_fake.shape and d_real.dtype == d_fake.dtype:
        loss_real, loss_fake = _bce_mean_pair(d_real, d_fake,
                                              with_logits=with_logits)
    else:  # different shapes -> cannot share a grid; fall back to two launches
        loss_real = _bce_mean(d_real, target_one=True, with_logits=with_logits)
        loss_fake = _bce_mean(d_fake, target_one=False, with_logits=with_logits)
    return loss_real + loss_fake, loss_real, loss_fake


@functools.partial(jax.jit, static_argnames=("with_logits",))
def _forward_g_impl(d_fake, with_logits):
    return _bce_mean(d_fake, target_one=True, with_logits=with_logits)


class VanillaGANLoss:
    """JAX/Pallas port of the PyTorch VanillaGANLoss module (forward pass)."""

    def __init__(self, w_sigmoid_D: bool = True):
        # w_sigmoid_D=True  -> D already applies sigmoid -> BCELoss
        # w_sigmoid_D=False -> raw logits -> BCEWithLogitsLoss
        self.with_logits = not w_sigmoid_D

    def forward_D(self, d_real, d_fake):
        return _forward_d_impl(d_real, d_fake, self.with_logits)

    def forward_G(self, d_fake):
        return _forward_g_impl(d_fake, self.with_logits)

    def __call__(self, d_real, d_fake, dis_or_gen: bool = True):
        if dis_or_gen:
            loss, _, _ = self.forward_D(d_real, d_fake)
        else:
            loss = self.forward_G(d_fake)
        return loss


# ---------------------------------------------------------------------------
# Self-test
# ---------------------------------------------------------------------------

def _reference_bce_mean(x, target_one, with_logits):
    x = x.astype(jnp.float32)
    if with_logits:
        y = 1.0 if target_one else 0.0
        t = jnp.maximum(x, 0.0) - x * y + jnp.log1p(jnp.exp(-jnp.abs(x)))
    else:
        t = -jnp.maximum(jnp.log(x if target_one else 1.0 - x), -100.0)
    return jnp.mean(t)


if __name__ == "__main__":
    key = jax.random.PRNGKey(0)
    k1, k2 = jax.random.split(key)

    # Patch-GAN style discriminator outputs: NCHW = (2, 4, 16, 16).
    d_real = jax.nn.sigmoid(jax.random.normal(k1, (2, 4, 16, 16), jnp.float32))
    d_fake = jax.nn.sigmoid(jax.random.normal(k2, (2, 4, 16, 16), jnp.float32))

    loss_mod = VanillaGANLoss(w_sigmoid_D=True)

    # Discriminator and generator losses (fused kernel + single kernel).
    loss_D = loss_mod(d_real, d_fake, dis_or_gen=True)
    loss_G = loss_mod(d_real, d_fake, dis_or_gen=False)
    jax.block_until_ready((loss_D, loss_G))

    ref_D = (_reference_bce_mean(d_real, True, False)
             + _reference_bce_mean(d_fake, False, False))
    ref_G = _reference_bce_mean(d_fake, True, False)
    assert jnp.allclose(loss_D, ref_D, rtol=1e-5, atol=1e-5), (loss_D, ref_D)
    assert jnp.allclose(loss_G, ref_G, rtol=1e-5, atol=1e-5), (loss_G, ref_G)

    # BCEWithLogitsLoss path (w_sigmoid_D=False).
    logits_real = jax.random.normal(k1, (2, 4, 16, 16), jnp.float32)
    logits_fake = jax.random.normal(k2, (2, 4, 16, 16), jnp.float32)
    loss_mod_l = VanillaGANLoss(w_sigmoid_D=False)
    loss_D_l, _, _ = loss_mod_l.forward_D(logits_real, logits_fake)
    jax.block_until_ready(loss_D_l)
    ref_D_l = (_reference_bce_mean(logits_real, True, True)
               + _reference_bce_mean(logits_fake, False, True))
    assert jnp.allclose(loss_D_l, ref_D_l, rtol=1e-5, atol=1e-5), (loss_D_l, ref_D_l)

    # Padding path: element count not a multiple of 128 (210 elements).
    k3, k4 = jax.random.split(k2)
    d_real_odd = jax.nn.sigmoid(jax.random.normal(k3, (2, 3, 7, 5), jnp.float32))
    d_fake_odd = jax.nn.sigmoid(jax.random.normal(k4, (2, 3, 7, 5), jnp.float32))
    loss_D_odd = loss_mod(d_real_odd, d_fake_odd, dis_or_gen=True)
    jax.block_until_ready(loss_D_odd)
    ref_D_odd = (_reference_bce_mean(d_real_odd, True, False)
                 + _reference_bce_mean(d_fake_odd, False, False))
    assert jnp.allclose(loss_D_odd, ref_D_odd, rtol=1e-5, atol=1e-5), (loss_D_odd, ref_D_odd)

    # Multi-block path with an odd block count: exercises the 2-way core split,
    # the in-kernel edge mask and the clamped index_map (one fully-OOB block).
    k5, k6 = jax.random.split(k4)
    big_real = jax.nn.sigmoid(jax.random.normal(k5, (2, 1, 640, 480), jnp.float32))
    big_fake = jax.nn.sigmoid(jax.random.normal(k6, (2, 1, 640, 480), jnp.float32))
    loss_D_big = loss_mod(big_real, big_fake, dis_or_gen=True)
    jax.block_until_ready(loss_D_big)
    ref_D_big = (_reference_bce_mean(big_real, True, False)
                 + _reference_bce_mean(big_fake, False, False))
    assert jnp.allclose(loss_D_big, ref_D_big, rtol=1e-4, atol=1e-5), (loss_D_big, ref_D_big)

    # Native bf16 inputs stay bf16 on the HBM wire (upcast only in-kernel).
    loss_D_bf16 = loss_mod(d_real.astype(jnp.bfloat16),
                           d_fake.astype(jnp.bfloat16), dis_or_gen=True)
    jax.block_until_ready(loss_D_bf16)
    ref_D_bf16 = (_reference_bce_mean(d_real.astype(jnp.bfloat16), True, False)
                  + _reference_bce_mean(d_fake.astype(jnp.bfloat16), False, False))
    assert jnp.allclose(loss_D_bf16, ref_D_bf16, rtol=1e-2, atol=1e-2), (loss_D_bf16, ref_D_bf16)

    print("KERNEL_OK")
</pallas_src>

<mosaic_0001>
module attributes {stable_mosaic.version = 11 : i64} {
  func.func @_bce_fused_kernel(%arg0: i32, %arg1: i32, %arg2: memref<16x128xf32, #tpu.memory_space<vmem>>, %arg3: memref<16x128xf32, #tpu.memory_space<vmem>>, %arg4: memref<8x128xf32, #tpu.memory_space<vmem>>, %arg5: memref<8x128xf32, #tpu.memory_space<vmem>>) attributes {dimension_semantics = [#tpu.dimension_semantics<parallel>, #tpu.dimension_semantics<arbitrary>], iteration_bounds = array<i64: 1, 1>, scalar_prefetch = 0 : i64, scratch_operands = 0 : i64, tpu.core_type = #tpu.core_type<tc>, window_params = [{transform_indices = @transform_0, window_bounds = array<i64: 16, 128>}, {transform_indices = @transform_1, window_bounds = array<i64: 16, 128>}, {transform_indices = @transform_2, window_bounds = array<i64: 8, 128>}, {transform_indices = @transform_3, window_bounds = array<i64: 8, 128>}]} {
    %c0_i32 = arith.constant 0 : i32
    %0 = arith.cmpi eq, %arg1, %c0_i32 : i32
    %1 = arith.extui %0 : i1 to i32
    %c0_i32_0 = arith.constant 0 : i32
    %2 = arith.cmpi ne, %1, %c0_i32_0 : i32
    scf.if %2 {
      %cst_18 = arith.constant 0.000000e+00 : f32
      %27 = vector.broadcast %cst_18 : f32 to vector<8x128xf32>
      %c0_19 = arith.constant 0 : index
      %c0_20 = arith.constant 0 : index
      %28 = vector.load %arg4[%c0_19, %c0_20] : memref<8x128xf32, #tpu.memory_space<vmem>>, vector<8x128xf32>
      tpu.vector_store %arg4[%c0_19, %c0_20], %27 {strides = array<i32>} : memref<8x128xf32, #tpu.memory_space<vmem>>, vector<8x128xf32>,
      %cst_21 = arith.constant 0.000000e+00 : f32
      %29 = vector.broadcast %cst_21 : f32 to vector<8x128xf32>
      %c0_22 = arith.constant 0 : index
      %c0_23 = arith.constant 0 : index
      %30 = vector.load %arg5[%c0_22, %c0_23] : memref<8x128xf32, #tpu.memory_space<vmem>>, vector<8x128xf32>
      tpu.vector_store %arg5[%c0_22, %c0_23], %29 {strides = array<i32>} : memref<8x128xf32, #tpu.memory_space<vmem>>, vector<8x128xf32>,
    } else {
    }
    %c0 = arith.constant 0 : index
    %c0_1 = arith.constant 0 : index
    %3 = vector.load %arg2[%c0, %c0_1] : memref<16x128xf32, #tpu.memory_space<vmem>>, vector<16x128xf32>
    %4 = math.log %3 : vector<16x128xf32>
    %cst = arith.constant -1.000000e+02 : f32
    %5 = vector.broadcast %cst : f32 to vector<16x128xf32>
    %6 = arith.maximumf %4, %5 : vector<16x128xf32>
    %cst_2 = arith.constant 0.000000e+00 : f32
    %7 = vector.broadcast %cst_2 : f32 to vector<16x128xf32>
    %8 = arith.subf %7, %6 : vector<16x128xf32>
    %c0_3 = arith.constant 0 : index
    %c0_4 = arith.constant 0 : index
    %9 = vector.load %arg3[%c0_3, %c0_4] : memref<16x128xf32, #tpu.memory_space<vmem>>, vector<16x128xf32>
    %cst_5 = arith.constant 1.000000e+00 : f32
    %10 = vector.broadcast %cst_5 : f32 to vector<16x128xf32>
    %11 = arith.subf %10, %9 : vector<16x128xf32>
    %12 = math.log %11 : vector<16x128xf32>
    %cst_6 = arith.constant -1.000000e+02 : f32
    %13 = vector.broadcast %cst_6 : f32 to vector<16x128xf32>
    %14 = arith.maximumf %12, %13 : vector<16x128xf32>
    %cst_7 = arith.constant 0.000000e+00 : f32
    %15 = vector.broadcast %cst_7 : f32 to vector<16x128xf32>
    %16 = arith.subf %15, %14 : vector<16x128xf32>
    %c0_8 = arith.constant 0 : index
    %c0_9 = arith.constant 0 : index
    %17 = vector.load %arg4[%c0_8, %c0_9] : memref<8x128xf32, #tpu.memory_space<vmem>>, vector<8x128xf32>
    %18 = vector.shape_cast %8 : vector<16x128xf32> to vector<2x8x128xf32>
    %cst_10 = arith.constant dense<0.000000e+00> : vector<8x128xf32>
    %19 = vector.multi_reduction <add>, %18, %cst_10 [0] : vector<2x8x128xf32> to vector<8x128xf32>
    %20 = arith.addf %17, %19 : vector<8x128xf32>
    %c0_11 = arith.constant 0 : index
    %c0_12 = arith.constant 0 : index
    %21 = vector.load %arg4[%c0_11, %c0_12] : memref<8x128xf32, #tpu.memory_space<vmem>>, vector<8x128xf32>
    tpu.vector_store %arg4[%c0_11, %c0_12], %20 {strides = array<i32>} : memref<8x128xf32, #tpu.memory_space<vmem>>, vector<8x128xf32>,
    %c0_13 = arith.constant 0 : index
    %c0_14 = arith.constant 0 : index
    %22 = vector.load %arg5[%c0_13, %c0_14] : memref<8x128xf32, #tpu.memory_space<vmem>>, vector<8x128xf32>
    %23 = vector.shape_cast %16 : vector<16x128xf32> to vector<2x8x128xf32>
    %cst_15 = arith.constant dense<0.000000e+00> : vector<8x128xf32>
    %24 = vector.multi_reduction <add>, %23, %cst_15 [0] : vector<2x8x128xf32> to vector<8x128xf32>
    %25 = arith.addf %22, %24 : vector<8x128xf32>
    %c0_16 = arith.constant 0 : index
    %c0_17 = arith.constant 0 : index
    %26 = vector.load %arg5[%c0_16, %c0_17] : memref<8x128xf32, #tpu.memory_space<vmem>>, vector<8x128xf32>
    tpu.vector_store %arg5[%c0_16, %c0_17], %25 {strides = array<i32>} : memref<8x128xf32, #tpu.memory_space<vmem>>, vector<8x128xf32>,
    return
  }
  func.func @transform_0(%arg0: i32, %arg1: i32) -> (i32, i32) {
    %c1_i32 = arith.constant 1 : i32
    %0 = arith.muli %arg0, %c1_i32 : i32
    %1 = arith.addi %0, %arg1 : i32
    %c0_i32 = arith.constant 0 : i32
    %2 = arith.minsi %1, %c0_i32 : i32
    %c0_i32_0 = arith.constant 0 : i32
    %c0_i32_1 = arith.constant 0 : i32
    return %2, %c0_i32_0 : i32, i32
  }
  func.func @transform_1(%arg0: i32, %arg1: i32) -> (i32, i32) {
    %c1_i32 = arith.constant 1 : i32
    %0 = arith.muli %arg0, %c1_i32 : i32
    %1 = arith.addi %0, %arg1 : i32
    %c0_i32 = arith.constant 0 : i32
    %2 = arith.minsi %1, %c0_i32 : i32
    %c0_i32_0 = arith.constant 0 : i32
    %c0_i32_1 = arith.constant 0 : i32
    return %2, %c0_i32_0 : i32, i32
  }
  func.func @transform_2(%arg0: i32, %arg1: i32) -> (i32, i32) {
    %c0_i32 = arith.constant 0 : i32
    %c0_i32_0 = arith.constant 0 : i32
    return %arg0, %c0_i32 : i32, i32
  }
  func.func @transform_3(%arg0: i32, %arg1: i32) -> (i32, i32) {
    %c0_i32 = arith.constant 0 : i32
    %c0_i32_0 = arith.constant 0 : i32
    return %arg0, %c0_i32 : i32, i32
  }
}

</mosaic_0001>

<llo_original>
// kernel: _forward_d_impl.1
$region0: #{_forward_d_impl.1}
  #allocation0 [shape = 'u32[]', space=smem, size = 0x4, offset = 0x4, fixed_abs, tag = 'smem constant byte address 0x4 - core index']
  #allocation1 [shape = 'u32[144,128]{1,0:T(1,128)}', space=vmem, size = 0x12000, scoped, tag = 'internal scratch']
  %s0 = inlined_call_operand.vmem [shape: f32[16,128], index: 0, kind: input, shape index: {}]
  %s1 = inlined_call_operand.vmem [shape: f32[16,128], index: 1, kind: input, shape index: {}]
  %s2 = inlined_call_operand.vmem [shape: f32[8,128], index: 2, kind: output, shape index: {0}]
  %s3 = inlined_call_operand.vmem [shape: f32[8,128], index: 3, kind: output, shape index: {1}]
  %4 = xla_tuple %s2, %s3
  %s5 = sld [smem:[#allocation0]]
  $region30: #{_forward_d_impl.1} parent=0
    _
  %s7 = ssub.s32 1, %s5
  %s8 = scalar_select 0, %s7, %s5
  // Predicated region
  $region2: #{_forward_d_impl.1} parent=0 // pred_check
    _
  $region3: #{_forward_d_impl.1} parent=0 // pred_check_branch
    %10 = sbr.rel (0) target = $region5
  $region4: #{_forward_d_impl.1} parent=0 // pred_region
    %s11 = sadd.s32 0, 0
    %p12 = scmp.lt.s32.totalorder %s11, 0
    %s13 = scalar_select %p12, %s11, 0
    %s14 = smul.u32 2, %s13
    %p15 = scmp.lt.s32.totalorder %s14, 1
    %s16 = scalar_select %p15, %s14, 1
    %s17 = smul.addr %s16, 8
    %s18 = scalar_lea.vmem %s0, %s17
    %s19 = sadd.s32 0, 0
    %p20 = scmp.lt.s32.totalorder %s19, 0
    %s21 = scalar_select %p20, %s19, 0
    %s22 = smul.u32 2, %s21
  $region5: #{_forward_d_impl.1} parent=0 // pred_fallthru
    _
  // Predicated region
  $region6: #{_forward_d_impl.1} parent=0 // pred_check
    _
  $region7: #{_forward_d_impl.1} parent=0 // pred_check_branch
    %24 = sbr.rel (0) target = $region9
  $region8: #{_forward_d_impl.1} parent=0 // pred_region
    %s25 = sadd.s32 0, 0
    %p26 = scmp.lt.s32.totalorder %s25, 0
    %s27 = scalar_select %p26, %s25, 0
    %s28 = smul.u32 2, %s27
    %p29 = scmp.lt.s32.totalorder %s28, 1
    %s30 = scalar_select %p29, %s28, 1
    %s31 = smul.addr %s30, 8
    %s32 = scalar_lea.vmem %s1, %s31
    %s33 = sadd.s32 0, 0
    %p34 = scmp.lt.s32.totalorder %s33, 0
    %s35 = scalar_select %p34, %s33, 0
    %s36 = smul.u32 2, %s35
  $region9: #{_forward_d_impl.1} parent=0 // pred_fallthru
    _
  %s37 = sadd.s32 0, 0
  %p38 = scmp.lt.s32.totalorder %s37, 0
  %s39 = scalar_select %p38, %s37, 0
  %s40 = smul.u32 2, %s39
  %p41 = scmp.lt.s32.totalorder %s40, 1
  %s42 = scalar_select %p41, %s40, 1
  %s43 = smul.addr %s42, 8
  %s44 = scalar_lea.vmem %s0, %s43
  %s45 = sadd.s32 0, 0
  %p46 = scmp.lt.s32.totalorder %s45, 0
  %s47 = scalar_select %p46, %s45, 0
  %s48 = smul.u32 2, %s47
  %p49 = scmp.lt.s32.totalorder %s48, 1
  %s50 = scalar_select %p49, %s48, 1
  %s51 = smul.addr %s50, 8
  %s52 = scalar_lea.vmem %s1, %s51
  %s53 = sadd.s32 0, 0
  %p54 = scmp.lt.s32.totalorder %s53, 0
  %s55 = scalar_select %p54, %s53, 0
  %s56 = smul.u32 2, %s55
  %p57 = scmp.lt.s32.totalorder %s56, 1
  %s58 = scalar_select %p57, %s56, 1
  %s59 = smul.addr %s58, 8
  %s60 = scalar_lea.vmem %s0, %s59
  %s61 = sadd.s32 0, 0
  %p62 = scmp.lt.s32.totalorder %s61, 0
  %s63 = scalar_select %p62, %s61, 0
  %s64 = smul.u32 2, %s63
  %s65 = sadd.s32 0, 0
  %p66 = scmp.lt.s32.totalorder %s65, 0
  %s67 = scalar_select %p66, %s65, 0
  %s68 = smul.u32 2, %s67
  %p69 = scmp.lt.s32.totalorder %s68, 1
  %s70 = scalar_select %p69, %s68, 1
  %s71 = smul.addr %s70, 8
  %s72 = scalar_lea.vmem %s1, %s71
  %s73 = sadd.s32 0, 0
  %p74 = scmp.lt.s32.totalorder %s73, 0
  %s75 = scalar_select %p74, %s73, 0
  %s76 = smul.u32 2, %s75
  %p77 = scmp.eq.s32.totalorder 0, 0
  // Predicated region
  $region10: #{_forward_d_impl.1} parent=0 // pred_check
    %p78 = pneg %p77
  $region11: #{_forward_d_impl.1} parent=0 // pred_check_branch
    %80 = sbr.rel (%p78) target = $region13
  $region12: #{_forward_d_impl.1} parent=0 // pred_region
    %81 = vst [vmem:[%s2] sm:$0xff] 0.0
    %82 = vst [vmem:[%s3] sm:$0xff] 0.0
  $region13: #{_forward_d_impl.1} parent=0 // pred_fallthru
    _
  %v83 = vld [vmem:[%s60] sm:$0xff]
  %v84 = vld [vmem:[%s60 + $0x8] sm:$0xff]
  %v85 = vlog2.pop %v83
  %v86 = vmul.f32 %v85, 0.6931472
  %v87 = vlog2.pop %v84
  %v88 = vmul.f32 %v87, 0.6931472
  %v89 = vmax.f32 %v86, -100.0
  %v90 = vmax.f32 %v88, -100.0
  %v91 = vsub.f32 0.0, %v89
  %v92 = vsub.f32 0.0, %v90
  %v93 = vld [vmem:[%s72] sm:$0xff]
  %v94 = vld [vmem:[%s72 + $0x8] sm:$0xff]
  %v95 = vsub.f32 1.0, %v93
  %v96 = vsub.f32 1.0, %v94
  %v97 = vlog2.pop %v95
  %v98 = vmul.f32 %v97, 0.6931472
  %v99 = vlog2.pop %v96
  %v100 = vmul.f32 %v99, 0.6931472
  %v101 = vmax.f32 %v98, -100.0
  %v102 = vmax.f32 %v100, -100.0
  %v103 = vsub.f32 0.0, %v101
  %v104 = vsub.f32 0.0, %v102
  %v105 = vld [vmem:[%s2] sm:$0xff]
  %v106 = vadd.f32 %v91, %v92
  %v107 = vadd.f32 %v105, %v106
  %108 = vst [vmem:[%s2] sm:$0xff] %v107
  %v109 = vld [vmem:[%s3] sm:$0xff]
  %v110 = vadd.f32 %v103, %v104
  %v111 = vadd.f32 %v109, %v110
  %112 = vst [vmem:[%s3] sm:$0xff] %v111
  // Predicated region
  $region14: #{_forward_d_impl.1} parent=0 // pred_check
    _
  $region15: #{_forward_d_impl.1} parent=0 // pred_check_branch
    %114 = sbr.rel (0) target = $region17
  $region16: #{_forward_d_impl.1} parent=0 // pred_region
    _
  $region17: #{_forward_d_impl.1} parent=0 // pred_fallthru
    _
  // Predicated region
  $region18: #{_forward_d_impl.1} parent=0 // pred_check
    _
  $region19: #{_forward_d_impl.1} parent=0 // pred_check_branch
    %116 = sbr.rel (0) target = $region21
  $region20: #{_forward_d_impl.1} parent=0 // pred_region
    _
  $region21: #{_forward_d_impl.1} parent=0 // pred_fallthru
    _
  // Predicated region
  $region22: #{_forward_d_impl.1} parent=0 // pred_check
    _
  $region23: #{_forward_d_impl.1} parent=0 // pred_check_branch
    %118 = sbr.rel (0) target = $region25
  $region24: #{_forward_d_impl.1} parent=0 // pred_region
    _
  $region25: #{_forward_d_impl.1} parent=0 // pred_fallthru
    _
  // Predicated region
  $region26: #{_forward_d_impl.1} parent=0 // pred_check
    _
  $region27: #{_forward_d_impl.1} parent=0 // pred_check_branch
    %120 = sbr.rel (0) target = $region29
  $region28: #{_forward_d_impl.1} parent=0 // pred_region
    _
  $region29: #{_forward_d_impl.1} parent=0 // pred_fallthru
    _

</llo_original>
